<compile_context>
chip_gen: v5e
topology: v5e:2x2
jax: 0.10.0
libtpu: 0.0.40
codegen_flags: <defaults>
</compile_context>

<pallas_src>
import jax
import jax.numpy as jnp
from jax import lax
from jax.experimental import pallas as pl
from jax.experimental.pallas import tpu as pltpu


def _patch_embed_kernel(patches_ref, w_ref, posb_ref, out_ref):
    # patches_ref: (1, TN, K)  patch rows for (batch b, patch-tile n)
    # w_ref:       (K, E)      projection weight (grid-invariant, stays resident in VMEM)
    # posb_ref:    (TN, E)     positional embedding (+ conv bias) rows for this tile
    # out_ref:     (1, TN, E)
    acc = jnp.dot(patches_ref[0], w_ref[...], preferred_element_type=jnp.float32)
    acc = acc + posb_ref[...].astype(jnp.float32)
    out_ref[0] = acc.astype(out_ref.dtype)


def _choose_tile_n(n, max_tile=512):
    """Largest tile <= max_tile that divides n and respects the (8,128) sublane rule."""
    if n <= max_tile:
        return n
    start = max_tile - (max_tile % 8)
    for t in range(start, 7, -8):
        if n % t == 0:
            return t
    return n  # fall back to the full patch axis (always legal: equals array dim)


def vit_embedding(x, conv_weight, conv_bias, pos_embed, dropout_p=0.0):
    """Forward pass of ViTEmbedding.

    x:           (B, C, H, W)
    conv_weight: (E, C, P, P)   PyTorch Conv2d weight layout
    conv_bias:   (E,)
    pos_embed:   (1, N, E) or (N, E)
    returns:     (B, N, E)
    """
    B, C, H, W = x.shape
    E, C2, P, P2 = conv_weight.shape
    assert C == C2 and P == P2 and H % P == 0 and W % P == 0
    GH, GW = H // P, W // P
    N = GH * GW
    K = C * P * P

    # Patchify: stride==kernel conv == matmul over unfolded patches.  Row order
    # (C, ph, pw) matches the flattened Conv2d weight layout (E, C*P*P).
    patches = x.reshape(B, C, GH, P, GW, P)
    patches = patches.transpose(0, 2, 4, 1, 3, 5).reshape(B, N, K)

    w = conv_weight.reshape(E, K).T                              # (K, E)
    # Fold conv bias into the positional embedding once (tiny (N, E) add done by
    # XLA), removing one operand stream and one VALU add per kernel tile.
    pos_bias = pos_embed.reshape(N, E).astype(jnp.float32) + conv_bias.reshape(1, E).astype(jnp.float32)
    pos_bias = pos_bias.astype(pos_embed.dtype)

    tn = _choose_tile_n(N)
    grid = (B, N // tn)

    cost = pl.CostEstimate(
        flops=2 * B * N * K * E,
        transcendentals=0,
        bytes_accessed=(patches.size + w.size + pos_bias.size + B * N * E) * x.dtype.itemsize,
    )

    out = pl.pallas_call(
        _patch_embed_kernel,
        out_shape=jax.ShapeDtypeStruct((B, N, E), x.dtype),
        grid=grid,
        in_specs=[
            pl.BlockSpec((1, tn, K), lambda bi, ni: (bi, ni, 0)),   # patch rows
            pl.BlockSpec((K, E), lambda bi, ni: (0, 0)),            # weight (resident)
            pl.BlockSpec((tn, E), lambda bi, ni: (ni, 0)),          # pos embed (+bias) tile
        ],
        out_specs=pl.BlockSpec((1, tn, E), lambda bi, ni: (bi, ni, 0)),
        compiler_params=pltpu.CompilerParams(
            dimension_semantics=("parallel", "parallel")),
        cost_estimate=cost,
    )(patches, w, pos_bias)

    # TODO(synk): training-mode Dropout (stateful PRNG mask + 1/(1-p) rescale) is not
    # implemented; this forward matches eval/inference semantics (identity).
    del dropout_p
    return out


def _reference(x, conv_weight, conv_bias, pos_embed):
    """Pure-JAX reference using lax.conv (PyTorch Conv2d semantics)."""
    P = conv_weight.shape[-1]
    y = lax.conv_general_dilated(
        x.astype(jnp.float32), conv_weight.astype(jnp.float32),
        window_strides=(P, P), padding="VALID",
        dimension_numbers=("NCHW", "OIHW", "NCHW"),
        precision=lax.Precision.HIGHEST)
    B, E, GH, GW = y.shape
    y = y.reshape(B, E, GH * GW).transpose(0, 2, 1)      # (B, N, E)
    return y + conv_bias.reshape(1, 1, E) + pos_embed.reshape(1, GH * GW, E)


if __name__ == "__main__":
    key = jax.random.PRNGKey(0)
    k1, k2, k3 = jax.random.split(key, 3)

    # Small shapes consistent with the module: img=16, patch=4, chans=4, embed=32.
    B, C, H, W = 2, 4, 16, 16
    P, E = 4, 32
    N = (H // P) * (W // P)          # 16 patches
    K = C * P * P                    # 64

    x = jax.random.normal(k1, (B, C, H, W), dtype=jnp.float32)
    # lecun_normal conv weight, zeros bias, trunc_normal(std=0.02) position embedding.
    conv_weight = jax.random.normal(k2, (E, C, P, P), dtype=jnp.float32) / jnp.sqrt(float(K))
    conv_bias = jnp.zeros((E,), dtype=jnp.float32)
    pos_embed = 0.02 * jax.random.truncated_normal(k3, -2.0, 2.0, (1, N, E), dtype=jnp.float32)

    out = vit_embedding(x, conv_weight, conv_bias, pos_embed, dropout_p=0.1)
    out = jax.block_until_ready(out)

    ref = _reference(x, conv_weight, conv_bias, pos_embed)
    assert out.shape == (B, N, E), out.shape
    assert jnp.allclose(out, ref, rtol=1e-4, atol=1e-4), float(jnp.max(jnp.abs(out - ref)))

    print("KERNEL_OK")
</pallas_src>

<mosaic_0001>
module attributes {stable_mosaic.version = 11 : i64} {
  func.func @_patch_embed_kernel(%arg0: i32, %arg1: i32, %arg2: memref<1x16x64xf32, #tpu.memory_space<vmem>>, %arg3: memref<64x32xf32, #tpu.memory_space<vmem>>, %arg4: memref<16x32xf32, #tpu.memory_space<vmem>>, %arg5: memref<1x16x32xf32, #tpu.memory_space<vmem>>) attributes {dimension_semantics = [#tpu.dimension_semantics<parallel>, #tpu.dimension_semantics<parallel>], iteration_bounds = array<i64: 2, 1>, scalar_prefetch = 0 : i64, scratch_operands = 0 : i64, tpu.core_type = #tpu.core_type<tc>, window_params = [{transform_indices = @transform_0, window_bounds = array<i64: 1, 16, 64>}, {pipeline_mode = #tpu.pipeline_mode<synchronous>, transform_indices = @transform_1, window_bounds = array<i64: 64, 32>}, {transform_indices = @transform_2, window_bounds = array<i64: 16, 32>}, {transform_indices = @transform_3, window_bounds = array<i64: 1, 16, 32>}]} {
    %c0 = arith.constant 0 : index
    %c0_0 = arith.constant 0 : index
    %c0_1 = arith.constant 0 : index
    %0 = vector.load %arg2[%c0, %c0_0, %c0_1] : memref<1x16x64xf32, #tpu.memory_space<vmem>>, vector<1x16x64xf32>
    %1 = vector.shape_cast %0 : vector<1x16x64xf32> to vector<16x64xf32>
    %c0_2 = arith.constant 0 : index
    %c0_3 = arith.constant 0 : index
    %2 = vector.load %arg3[%c0_2, %c0_3] : memref<64x32xf32, #tpu.memory_space<vmem>>, vector<64x32xf32>
    %cst = arith.constant dense<0.000000e+00> : vector<16x32xf32>
    %3 = tpu.matmul %1, %2, %cst {dimension_numbers = #tpu.dot_dimension_numbers<[1], [0], [0], [1], [0, 0, 1, 1], [], []>} : vector<16x64xf32>, vector<64x32xf32>, vector<16x32xf32> -> vector<16x32xf32>
    %c0_4 = arith.constant 0 : index
    %c0_5 = arith.constant 0 : index
    %4 = vector.load %arg4[%c0_4, %c0_5] : memref<16x32xf32, #tpu.memory_space<vmem>>, vector<16x32xf32>
    %5 = arith.addf %3, %4 : vector<16x32xf32>
    %c0_6 = arith.constant 0 : index
    %c0_7 = arith.constant 0 : index
    %c0_8 = arith.constant 0 : index
    %6 = vector.load %arg5[%c0_6, %c0_7, %c0_8] : memref<1x16x32xf32, #tpu.memory_space<vmem>>, vector<1x16x32xf32>
    %7 = vector.shape_cast %6 : vector<1x16x32xf32> to vector<16x32xf32>
    %8 = vector.shape_cast %5 : vector<16x32xf32> to vector<1x16x32xf32>
    tpu.vector_store %arg5[%c0_6, %c0_7, %c0_8], %8 {strides = array<i32>} : memref<1x16x32xf32, #tpu.memory_space<vmem>>, vector<1x16x32xf32>,
    return
  }
  func.func @transform_0(%arg0: i32, %arg1: i32) -> (i32, i32, i32) {
    %c0_i32 = arith.constant 0 : i32
    %c0_i32_0 = arith.constant 0 : i32
    return %arg0, %arg1, %c0_i32 : i32, i32, i32
  }
  func.func @transform_1(%arg0: i32, %arg1: i32) -> (i32, i32) {
    %c0_i32 = arith.constant 0 : i32
    %c0_i32_0 = arith.constant 0 : i32
    %c0_i32_1 = arith.constant 0 : i32
    return %c0_i32, %c0_i32_0 : i32, i32
  }
  func.func @transform_2(%arg0: i32, %arg1: i32) -> (i32, i32) {
    %c0_i32 = arith.constant 0 : i32
    %c0_i32_0 = arith.constant 0 : i32
    return %arg1, %c0_i32 : i32, i32
  }
  func.func @transform_3(%arg0: i32, %arg1: i32) -> (i32, i32, i32) {
    %c0_i32 = arith.constant 0 : i32
    %c0_i32_0 = arith.constant 0 : i32
    return %arg0, %arg1, %c0_i32 : i32, i32, i32
  }
}

</mosaic_0001>

<llo_original>
// kernel: tpu_custom_call.1
$region0: #{tpu_custom_call.1}
  #allocation0 [shape = 'u32[]', space=smem, size = 0x4, offset = 0x4, fixed_abs, tag = 'smem constant byte address 0x4 - core index']
  #allocation1 [shape = 'u32[72,128]{1,0:T(1,128)}', space=vmem, size = 0x9000, scoped, tag = 'internal scratch']
  %s0 = inlined_call_operand.vmem [shape: f32[2,16,64], index: 0, kind: input, shape index: {}]
  %s1 = inlined_call_operand.vmem [shape: f32[64,32], index: 1, kind: input, shape index: {}]
  %s2 = inlined_call_operand.vmem [shape: f32[16,32], index: 2, kind: input, shape index: {}]
  %s3 = inlined_call_operand.hbm [shape: f32[2,16,32], index: 3, kind: output, shape index: {}]
  %s4 = sld [smem:[#allocation0]]
  $region45: #{tpu_custom_call.1} parent=0
    _
  %s6 = ssub.s32 1, %s4
  %s7 = scalar_select 0, %s6, %s4
  $region1: #{tpu_custom_call.1} parent=0
    #allocation2 [shape = 'u8[16384]{0}', space=vmem, size = 0x4000, scoped, tag = 'output window, operand 0']
    #allocation3 [shape = 's32[2]{0}', space=sflag, size = 0x8, scoped, tag = 'scoped memory for tpu_custom_call.1']
    %8 = vsyncpa [#allocation3], 0
    %s9 = scalar_lea.sflag [#allocation3], 1
    %10 = vsyncpa %s9, 0
    loop: start=0, step=1, limit=4
    $region2: #{tpu_custom_call.1} parent=1 // loop_pre_header
      _
    $region3: #{tpu_custom_call.1} parent=1 // loop_header
      %s12 = sphi 0, %s16
      %p13 = scmp.ge.s32.totalorder %s12, 4
      %s19 = sphi 0, %s31
      %s20 = sphi 0, %s27
      %s21 = sphi 0, %s19
      %s22 = sphi 0, %s20
      %s23 = sphi 0, %s21
      %s24 = sphi 0, %s22
      %s36 = sphi 0, %s38
      %s39 = sphi 0, %s36
      %s40 = sphi 0, %s39
      %s56 = sphi 0, %s40
      %s60 = sphi 0, %s60
      %s62 = sphi 0, %s60
      %s63 = sphi 0, %s62
      %s77 = sphi 0, %s63
      %s83 = sphi 0, %s85
      %s86 = sphi 0, %s83
      %s87 = sphi 0, %s86
      %s103 = sphi 0, %s87
      %s111 = sphi 0, %s113
      %s114 = sphi 0, %s111
      %s115 = sphi 0, %s114
      %s131 = sphi 0, %s115
    $region4: #{tpu_custom_call.1} parent=1 // loop_header_branch
      %15 = sbr.rel (%p13) target = $region8
    $region5: #{tpu_custom_call.1} parent=1 // loop_body
      %s17 = ssub.s32 %s12, 1
      %s18 = ssub.s32 %s12, 2
      %s25 = sadd.s32 1, %s20
      %p26 = scmp.ge.s32.totalorder %s25, 1
      %s27 = scalar_select %p26, 0, %s25
      %s28 = sadd.s32 1, %s19
      %s29 = scalar_select %p26, %s28, %s19
      %p30 = scmp.ge.s32.totalorder %s29, 2
      %s31 = scalar_select %p30, 0, %s29
      %s32 = ssub.s32 %s19, %s31
      %s33 = ssub.s32 %s20, %s27
      %s34 = sor.u32 %s32, %s33
      %p35 = scmp.eq.s32.totalorder %s34, 0
      %s37 = sadd.s32 %s36, 1
      %s38 = scalar_select %p35, %s36, %s37
      %p41 = pneg %p35
      %p42 = scmp.eq.s32.totalorder %s12, 1
      %p43 = por %p41, %p42
      %p44 = scmp.ne.s32.totalorder %s36, %s39
      %p45 = scmp.eq.s32.totalorder %s12, 0
      %p46 = por %p44, %p45
      %p47 = scmp.ne.s32.totalorder %s36, %s39
      %p48 = scmp.eq.s32.totalorder %s17, 1
      %p49 = por %p47, %p48
      %p50 = scmp.ne.s32.totalorder %s39, %s40
      %p51 = scmp.eq.s32.totalorder %s17, 0
      %p52 = por %p50, %p51
      %p53 = scmp.ne.s32.totalorder %s39, %s40
      %p54 = scmp.eq.s32.totalorder %s18, 1
      %p55 = por %p53, %p54
      %p57 = scmp.ne.s32.totalorder %s40, %s56
      %p58 = scmp.eq.s32.totalorder %s18, 0
      %p59 = por %p57, %p58
      %s61 = sadd.s32 %s60, 1
      %p64 = scmp.eq.s32.totalorder %s12, 1
      %p65 = scmp.ne.s32.totalorder %s60, %s62
      %p66 = scmp.eq.s32.totalorder %s12, 0
      %p67 = por %p65, %p66
      %p68 = scmp.ne.s32.totalorder %s60, %s62
      %p69 = scmp.eq.s32.totalorder %s17, 1
      %p70 = por %p68, %p69
      %p71 = scmp.ne.s32.totalorder %s62, %s63
      %p72 = scmp.eq.s32.totalorder %s17, 0
      %p73 = por %p71, %p72
      %p74 = scmp.ne.s32.totalorder %s62, %s63
      %p75 = scmp.eq.s32.totalorder %s18, 1
      %p76 = por %p74, %p75
      %p78 = scmp.ne.s32.totalorder %s63, %s77
      %p79 = scmp.eq.s32.totalorder %s18, 0
      %p80 = por %p78, %p79
      %s81 = ssub.s32 %s20, %s27
      %p82 = scmp.eq.s32.totalorder %s81, 0
      %s84 = sadd.s32 %s83, 1
      %s85 = scalar_select %p82, %s83, %s84
      %p88 = pneg %p82
      %p89 = scmp.eq.s32.totalorder %s12, 1
      %p90 = por %p88, %p89
      %p91 = scmp.ne.s32.totalorder %s83, %s86
      %p92 = scmp.eq.s32.totalorder %s12, 0
      %p93 = por %p91, %p92
      %p94 = scmp.ne.s32.totalorder %s83, %s86
      %p95 = scmp.eq.s32.totalorder %s17, 1
      %p96 = por %p94, %p95
      %p97 = scmp.ne.s32.totalorder %s86, %s87
      %p98 = scmp.eq.s32.totalorder %s17, 0
      %p99 = por %p97, %p98
      %p100 = scmp.ne.s32.totalorder %s86, %s87
      %p101 = scmp.eq.s32.totalorder %s18, 1
      %p102 = por %p100, %p101
      %p104 = scmp.ne.s32.totalorder %s87, %s103
      %p105 = scmp.eq.s32.totalorder %s18, 0
      %p106 = por %p104, %p105
      %s107 = ssub.s32 %s19, %s31
      %s108 = ssub.s32 %s20, %s27
      %s109 = sor.u32 %s107, %s108
      %p110 = scmp.eq.s32.totalorder %s109, 0
      %s112 = sadd.s32 %s111, 1
      %s113 = scalar_select %p110, %s111, %s112
      %p116 = pneg %p110
      %p117 = scmp.eq.s32.totalorder %s12, 1
      %p118 = por %p116, %p117
      %p119 = scmp.ne.s32.totalorder %s111, %s114
      %p120 = scmp.eq.s32.totalorder %s12, 0
      %p121 = por %p119, %p120
      %p122 = scmp.ne.s32.totalorder %s111, %s114
      %p123 = scmp.eq.s32.totalorder %s17, 1
      %p124 = por %p122, %p123
      %p125 = scmp.ne.s32.totalorder %s114, %s115
      %p126 = scmp.eq.s32.totalorder %s17, 0
      %p127 = por %p125, %p126
      %p128 = scmp.ne.s32.totalorder %s114, %s115
      %p129 = scmp.eq.s32.totalorder %s18, 1
      %p130 = por %p128, %p129
      %p132 = scmp.ne.s32.totalorder %s115, %s131
      %p133 = scmp.eq.s32.totalorder %s18, 0
      %p134 = por %p132, %p133
      %p135 = scmp.le.s32.totalorder 1, %s12
      %p136 = scmp.lt.s32.totalorder %s12, 3
      %p137 = pnand %p135, %p136
      %p138 = pneg %p137
      // Predicated region
      $region9: #{tpu_custom_call.1} parent=5 // pred_check
        _
      $region10: #{tpu_custom_call.1} parent=5 // pred_check_branch
        %140 = sbr.rel (%p137) target = $region12
      $region11: #{tpu_custom_call.1} parent=5 // pred_region
        %s141 = ssub.s32 %s12, 1
        // Predicated region
        $region13: #{tpu_custom_call.1} parent=11 // pred_check
          %p142 = pneg %p73
        $region14: #{tpu_custom_call.1} parent=11 // pred_check_branch
          %144 = sbr.rel (%p142) target = $region16
        $region15: #{tpu_custom_call.1} parent=11 // pred_region
          _
        $region16: #{tpu_custom_call.1} parent=11 // pred_fallthru
          _
        // Predicated region
        $region17: #{tpu_custom_call.1} parent=11 // pred_check
          %p145 = pneg %p99
        $region18: #{tpu_custom_call.1} parent=11 // pred_check_branch
          %147 = sbr.rel (%p145) target = $region20
        $region19: #{tpu_custom_call.1} parent=11 // pred_region
          %s148 = smul.u32 2, %s22
          %p149 = scmp.lt.s32.totalorder %s148, 1
          %s150 = scalar_select %p149, %s148, 1
          %s151 = smul.addr %s150, 8
          %s152 = scalar_lea.vmem %s2, %s151
          %s153 = smul.u32 2, %s22
        $region20: #{tpu_custom_call.1} parent=11 // pred_fallthru
          _
      $region12: #{tpu_custom_call.1} parent=5 // pred_fallthru
        _
      %p154 = scmp.lt.s32.totalorder %s12, 2
      // Predicated region
      $region21: #{tpu_custom_call.1} parent=5 // pred_check
        %p155 = pneg %p154
      $region22: #{tpu_custom_call.1} parent=5 // pred_check_branch
        %157 = sbr.rel (%p155) target = $region24
      $region23: #{tpu_custom_call.1} parent=5 // pred_region
        // Predicated region
        $region25: #{tpu_custom_call.1} parent=23 // pred_check
          %p158 = pneg %p46
        $region26: #{tpu_custom_call.1} parent=23 // pred_check_branch
          %160 = sbr.rel (%p158) target = $region28
        $region27: #{tpu_custom_call.1} parent=23 // pred_region
          %s161 = smul.u32 2, %s20
          %p162 = scmp.lt.s32.totalorder %s19, 1
          %s163 = scalar_select %p162, %s19, 1
          %p164 = scmp.lt.s32.totalorder %s161, 1
          %s165 = scalar_select %p164, %s161, 1
          %s166 = smul.addr %s163, 2
          %s167 = sadd.s32 %s165, %s166
          %s168 = smul.addr %s167, 8
          %s169 = scalar_lea.vmem %s0, %s168
          %s170 = smul.u32 2, %s20
        $region28: #{tpu_custom_call.1} parent=23 // pred_fallthru
          _
      $region24: #{tpu_custom_call.1} parent=5 // pred_fallthru
        _
      %p171 = scmp.le.s32.totalorder 1, %s12
      %p172 = scmp.lt.s32.totalorder %s12, 3
      %p173 = pnand %p171, %p172
      %p174 = pneg %p173
      // Predicated region
      $region29: #{tpu_custom_call.1} parent=5 // pred_check
        _
      $region30: #{tpu_custom_call.1} parent=5 // pred_check_branch
        %176 = sbr.rel (%p173) target = $region32
      $region31: #{tpu_custom_call.1} parent=5 // pred_region
        %s177 = ssub.s32 %s12, 1
        %s178 = smul.u32 2, %s22
        %p179 = scmp.lt.s32.totalorder %s21, 1
        %s180 = scalar_select %p179, %s21, 1
        %p181 = scmp.lt.s32.totalorder %s178, 1
        %s182 = scalar_select %p181, %s178, 1
        %s183 = smul.addr %s180, 2
        %s184 = sadd.s32 %s182, %s183
        %s185 = smul.addr %s184, 8
        %s186 = scalar_lea.vmem %s0, %s185
        %p187 = pneg %p52
        %p188 = pneg %p49
        %p189 = pneg %p73
        %p190 = pneg %p70
        %s191 = smul.u32 2, %s22
        %p192 = scmp.lt.s32.totalorder %s191, 1
        %s193 = scalar_select %p192, %s191, 1
        %s194 = smul.addr %s193, 8
        %s195 = scalar_lea.vmem %s2, %s194
        %p196 = pneg %p99
        %p197 = pneg %p96
        %p198 = pneg %p127
        %p199 = pneg %p124
        %s200 = sand.u32 %s114, 1
        %s201 = scalar_lea.sflag [#allocation3], %s200
        %s202 = sand.u32 %s114, 1
        %s203 = smul.addr %s202, 16
        %s204 = scalar_lea.vmem [#allocation2], %s203
        %s205 = smul.u32 2, %s22
        %p206 = scmp.lt.s32.totalorder %s21, 1
        %s207 = scalar_select %p206, %s21, 1
        %p208 = scmp.lt.s32.totalorder %s205, 1
        %s209 = scalar_select %p208, %s205, 1
        %s210 = smul.addr %s207, 2
        %s211 = sadd.s32 %s209, %s210
        %s212 = smul.addr %s211, 8
        %s213 = scalar_lea.vmem %s0, %s212
        %s214 = smul.u32 2, %s22
        %s215 = smul.u32 2, %s22
        %p216 = scmp.lt.s32.totalorder %s215, 1
        %s217 = scalar_select %p216, %s215, 1
        %s218 = smul.addr %s217, 8
        %s219 = scalar_lea.vmem %s2, %s218
        %s220 = smul.u32 2, %s22
        %s221 = smul.u32 2, %s22
        %v222 = vld [vmem:[%s213] sm:$0xff]
        %v223 = vld [vmem:[%s213 + $0x8] sm:$0xff]
        %v224 = vld [vmem:[%s1] sm:$0xff]
        %v225 = vld [vmem:[%s1 + $0x8] sm:$0xff]
        %v226 = vld [vmem:[%s1 + $0x10] sm:$0xff]
        %v227 = vld [vmem:[%s1 + $0x18] sm:$0xff]
        %v228 = vld [vmem:[%s1 + $0x20] sm:$0xff]
        %v229 = vld [vmem:[%s1 + $0x28] sm:$0xff]
        %v230 = vld [vmem:[%s1 + $0x30] sm:$0xff]
        %v231 = vld [vmem:[%s1 + $0x38] sm:$0xff]
        %v232 = vld [vmem:[%s219] sm:$0xff]
        %v233 = vld [vmem:[%s219 + $0x8] sm:$0xff]
        %vm234 = vcmask 523264
        %v236 = vsel %vm234, %v222, 0
        %v239 = vsel %vm234, %v223, 0
        %241 = vmatpush.msra.mxu0 0.0
        %242 = vmatpush.msra.mxu0 0.0
        %243 = vmatpush.msra.mxu0 0.0
        %244 = vmatpush.msra.mxu0 0.0
        %245 = vmatpush.msra.mxu0 0.0
        %246 = vmatpush.msra.mxu0 0.0
        %247 = vmatpush.msra.mxu0 0.0
        %248 = vmatpush.msra.mxu0 0.0
        %249 = vmatpush.msra.mxu0 %v231
        %250 = vmatpush.msra.mxu0 %v230
        %251 = vmatpush.msra.mxu0 %v229
        %252 = vmatpush.msra.mxu0 %v228
        %253 = vmatpush.msra.mxu0 %v227
        %254 = vmatpush.msra.mxu0 %v226
        %255 = vmatpush.msra.mxu0 %v225
        %256 = vmatpush.msra.mxu0 %v224
        %257 = vmatmul.f32.gmra.mxu0 %v236
        %v258 = vpop.f32.mrf.mxu0
        %v259 = vadd.f32 %v232, %v258
        %260 = vmatmul.f32.gmra.mxu0 %v239
        %v261 = vpop.f32.mrf.mxu0
        %v262 = vadd.f32 %v233, %v261
        %263 = vdwg.mxu0
        %vm264 = vcmask 261120
        %265 = vst.msk [vmem:[%s204] sm:$0xff] %vm264, %v259
        %266 = vst.msk [vmem:[%s204 + $0x8] sm:$0xff] %vm264, %v262
        %s267 = sand.u32 %s114, 1
        %s268 = scalar_lea.sflag [#allocation3], %s267
        %s269 = sand.u32 %s114, 1
        %s270 = smul.addr %s269, 16
        %s271 = scalar_lea.vmem [#allocation2], %s270
        // Predicated region
        $region33: #{tpu_custom_call.1} parent=31 // pred_check
          %p272 = pneg %p124
        $region34: #{tpu_custom_call.1} parent=31 // pred_check_branch
          %274 = sbr.rel (%p272) target = $region36
        $region35: #{tpu_custom_call.1} parent=31 // pred_region
          %s275 = smul.u32 2, %s22
          %277 = vsyncadd %s268, 0
          %s278 = smul.addr %s21, 2
          %s279 = sadd.s32 %s275, %s278
          %s280 = smul.addr %s279, 8
          %s281 = scalar_lea.hbm %s3, %s280
          %s282 = sshll.u32 %s271, 4
          %s283 = int_to_ptr.vmem [resolvable:$true] %s282
          %s284 = sshll.u32 %s281, 4
          %s285 = int_to_ptr.hbm [resolvable:$true] %s284
          %290 = dma.vmem_to_hbm [thread:$0]  %s283, 256, %s285, %s268, 128, 128, 8
        $region36: #{tpu_custom_call.1} parent=31 // pred_fallthru
          _
      $region32: #{tpu_custom_call.1} parent=5 // pred_fallthru
        _
      %p291 = scmp.le.s32.totalorder 2, %s12
      // Predicated region
      $region37: #{tpu_custom_call.1} parent=5 // pred_check
        %p292 = pneg %p291
      $region38: #{tpu_custom_call.1} parent=5 // pred_check_branch
        %294 = sbr.rel (%p292) target = $region40
      $region39: #{tpu_custom_call.1} parent=5 // pred_region
        %s295 = ssub.s32 %s12, 2
        // Predicated region
        $region41: #{tpu_custom_call.1} parent=39 // pred_check
          %p296 = pneg %p130
        $region42: #{tpu_custom_call.1} parent=39 // pred_check_branch
          %298 = sbr.rel (%p296) target = $region44
        $region43: #{tpu_custom_call.1} parent=39 // pred_region
          %s299 = sand.u32 %s115, 1
          %s300 = scalar_lea.sflag [#allocation3], %s299
          %s301 = sand.u32 %s115, 1
          %s302 = smul.addr %s301, 16
          %s303 = scalar_lea.vmem [#allocation2], %s302
          %305 = dma.done %s300, 256
        $region44: #{tpu_custom_call.1} parent=39 // pred_fallthru
          _
      $region40: #{tpu_custom_call.1} parent=5 // pred_fallthru
        _
    $region6: #{tpu_custom_call.1} parent=1 // loop_footer
      %s16 = sadd.s32 1, %s12
    $region7: #{tpu_custom_call.1} parent=1 // loop_footer_branch
      %11 = sbr.rel target = $region3
    $region8: #{tpu_custom_call.1} parent=1 // loop_exit
      _
    %306 = vsyncpa [#allocation3], 1
    %s307 = scalar_lea.sflag [#allocation3], 1
    %308 = vsyncpa %s307, 1

</llo_original>
